<compile_context>
chip_gen: v5e
topology: v5e:2x2
jax: 0.10.0
libtpu: 0.0.40
codegen_flags: <defaults>
</compile_context>

<pallas_src>
import jax
import jax.numpy as jnp
from jax.experimental import pallas as pl
from jax.experimental.pallas import tpu as pltpu


def _gaussian_kernel(val_ref, mean_ref, inv_std_ref, coef_ref, o_ref):
    # val_ref                     : (tm, 1) f32   per-node scalar mul*x + bias
    # mean_ref/inv_std_ref/coef_ref: (1, K) f32   broadcast rows
    # o_ref                       : (tm, K) out dtype (param dtype)
    val = val_ref[...]
    z = (val - mean_ref[...]) * inv_std_ref[...]          # (tm, K)
    o_ref[...] = (jnp.exp(-0.5 * z * z) * coef_ref[...]).astype(o_ref.dtype)


def _round_up(v, m):
    return ((v + m - 1) // m) * m


def node_gaussian_layer_forward(x, edge_types, means_w, stds_w, mul_w, bias_w,
                                *, K=128, tm=1024):
    """x: (B, N) float; edge_types: (B, N, T) int32.

    Returns (B, N, K) in the dtype of means_w (matches .type_as in torch).
    """
    B, N = x.shape

    # --- XLA glue: embedding lookups + sum over edge-type axis (dim=-2 in torch),
    #     fused with the val = mul*x + bias precompute. ---
    mul = jnp.take(mul_w[:, 0], edge_types, axis=0).sum(axis=-1)     # (B, N)
    bias = jnp.take(bias_w[:, 0], edge_types, axis=0).sum(axis=-1)   # (B, N)
    val = (mul.astype(jnp.float32) * x.astype(jnp.float32)
           + bias.astype(jnp.float32))                               # (B, N)

    M = B * N
    # Row tile: multiple of 32 (safe sublane multiple for f32/bf16 outputs);
    # shrink for tiny problems, pad M up to a tile multiple otherwise.
    tm_eff = min(tm, _round_up(M, 32))
    M_pad = _round_up(M, tm_eff)

    val_col = val.reshape(M, 1)
    if M_pad != M:
        val_col = jnp.pad(val_col, ((0, M_pad - M), (0, 0)))

    # Precompute reciprocals once on the (1, K) parameter rows.
    # NOTE: a uses 3.14159 (not math.pi) to match the torch.jit.script source.
    a = (2.0 * 3.14159) ** 0.5
    mean = means_w.astype(jnp.float32).reshape(1, K)
    inv_std = 1.0 / (jnp.abs(stds_w.astype(jnp.float32).reshape(1, K)) + 1e-5)
    coef = inv_std / a

    out_dtype = means_w.dtype

    out = pl.pallas_call(
        _gaussian_kernel,
        out_shape=jax.ShapeDtypeStruct((M_pad, K), out_dtype),
        grid_spec=pltpu.PrefetchScalarGridSpec(
            num_scalar_prefetch=0,
            grid=(M_pad // tm_eff,),
            in_specs=[
                pl.BlockSpec((tm_eff, 1), lambda i: (i, 0)),   # val column
                pl.BlockSpec((1, K), lambda i: (0, 0)),        # mean
                pl.BlockSpec((1, K), lambda i: (0, 0)),        # 1/std
                pl.BlockSpec((1, K), lambda i: (0, 0)),        # 1/(a*std)
            ],
            out_specs=pl.BlockSpec((tm_eff, K), lambda i: (i, 0)),
        ),
        compiler_params=pltpu.CompilerParams(
            dimension_semantics=("parallel",)),   # megacore sharding on v7x
    )(val_col, mean, inv_std, coef)

    return out[:M].reshape(B, N, K)


def _reference(x, edge_types, means_w, stds_w, mul_w, bias_w, K=128):
    mul = jnp.take(mul_w, edge_types, axis=0).sum(axis=-2)     # (B, N, 1)
    bias = jnp.take(bias_w, edge_types, axis=0).sum(axis=-2)   # (B, N, 1)
    v = mul * x[..., None] + bias                              # (B, N, 1)
    v = jnp.broadcast_to(v, v.shape[:-1] + (K,)).astype(jnp.float32)
    mean = means_w.astype(jnp.float32).reshape(-1)
    std = jnp.abs(stds_w.astype(jnp.float32).reshape(-1)) + 1e-5
    a = (2.0 * 3.14159) ** 0.5
    return (jnp.exp(-0.5 * ((v - mean) / std) ** 2) / (a * std)).astype(means_w.dtype)


if __name__ == "__main__":
    K = 128
    EDGE_TYPES = 1024
    B, N, T = 2, 8, 2

    key = jax.random.PRNGKey(0)
    k_means, k_stds, k_x, k_et = jax.random.split(key, 4)

    # Parameter init matching the module's __init__:
    #   means, stds ~ U(0, 3); bias = 0; mul = 1 (constant_ overrides the padding row too).
    means_w = jax.random.uniform(k_means, (1, K), jnp.float32, 0.0, 3.0)
    stds_w = jax.random.uniform(k_stds, (1, K), jnp.float32, 0.0, 3.0)
    mul_w = jnp.ones((EDGE_TYPES, 1), jnp.float32)
    bias_w = jnp.zeros((EDGE_TYPES, 1), jnp.float32)

    # Example inputs: per-node scalar features and integer edge types.
    x = jax.random.uniform(k_x, (B, N), jnp.float32, 0.0, 5.0)
    edge_types = jax.random.randint(k_et, (B, N, T), 0, EDGE_TYPES, jnp.int32)

    out = node_gaussian_layer_forward(x, edge_types, means_w, stds_w, mul_w, bias_w, K=K)
    out = jax.block_until_ready(out)

    ref = _reference(x, edge_types, means_w, stds_w, mul_w, bias_w, K=K)
    assert out.shape == (B, N, K)
    assert out.dtype == means_w.dtype
    # rtol slightly loosened vs the divide-based reference (kernel uses
    # precomputed reciprocals; couple-of-ulp differences through exp).
    assert jnp.allclose(out, ref, atol=1e-5, rtol=1e-4)

    print("KERNEL_OK")
</pallas_src>

<mosaic_0001>
module attributes {stable_mosaic.version = 11 : i64} {
  func.func @_gaussian_kernel(%arg0: i32, %arg1: memref<32x1xf32, #tpu.memory_space<vmem>>, %arg2: memref<1x128xf32, #tpu.memory_space<vmem>>, %arg3: memref<1x128xf32, #tpu.memory_space<vmem>>, %arg4: memref<1x128xf32, #tpu.memory_space<vmem>>, %arg5: memref<32x128xf32, #tpu.memory_space<vmem>>) attributes {dimension_semantics = [#tpu.dimension_semantics<parallel>], iteration_bounds = array<i64: 1>, scalar_prefetch = 0 : i64, scratch_operands = 0 : i64, tpu.core_type = #tpu.core_type<tc>, window_params = [{transform_indices = @transform_0, window_bounds = array<i64: 32, 1>}, {pipeline_mode = #tpu.pipeline_mode<synchronous>, transform_indices = @transform_1, window_bounds = array<i64: 1, 128>}, {pipeline_mode = #tpu.pipeline_mode<synchronous>, transform_indices = @transform_2, window_bounds = array<i64: 1, 128>}, {pipeline_mode = #tpu.pipeline_mode<synchronous>, transform_indices = @transform_3, window_bounds = array<i64: 1, 128>}, {transform_indices = @transform_4, window_bounds = array<i64: 32, 128>}]} {
    %c0 = arith.constant 0 : index
    %c0_0 = arith.constant 0 : index
    %0 = vector.load %arg1[%c0, %c0_0] : memref<32x1xf32, #tpu.memory_space<vmem>>, vector<32x1xf32>
    %c0_1 = arith.constant 0 : index
    %c0_2 = arith.constant 0 : index
    %1 = vector.load %arg2[%c0_1, %c0_2] : memref<1x128xf32, #tpu.memory_space<vmem>>, vector<1x128xf32>
    %2 = vector.broadcast %0 : vector<32x1xf32> to vector<32x128xf32>
    %3 = vector.broadcast %1 : vector<1x128xf32> to vector<32x128xf32>
    %4 = arith.subf %2, %3 : vector<32x128xf32>
    %c0_3 = arith.constant 0 : index
    %c0_4 = arith.constant 0 : index
    %5 = vector.load %arg3[%c0_3, %c0_4] : memref<1x128xf32, #tpu.memory_space<vmem>>, vector<1x128xf32>
    %6 = vector.broadcast %5 : vector<1x128xf32> to vector<32x128xf32>
    %7 = arith.mulf %4, %6 : vector<32x128xf32>
    %cst = arith.constant -5.000000e-01 : f32
    %8 = vector.broadcast %cst : f32 to vector<32x128xf32>
    %9 = arith.mulf %8, %7 : vector<32x128xf32>
    %10 = arith.mulf %9, %7 : vector<32x128xf32>
    %11 = math.exp %10 : vector<32x128xf32>
    %c0_5 = arith.constant 0 : index
    %c0_6 = arith.constant 0 : index
    %12 = vector.load %arg4[%c0_5, %c0_6] : memref<1x128xf32, #tpu.memory_space<vmem>>, vector<1x128xf32>
    %13 = vector.broadcast %12 : vector<1x128xf32> to vector<32x128xf32>
    %14 = arith.mulf %11, %13 : vector<32x128xf32>
    %c0_7 = arith.constant 0 : index
    %c0_8 = arith.constant 0 : index
    %15 = vector.load %arg5[%c0_7, %c0_8] : memref<32x128xf32, #tpu.memory_space<vmem>>, vector<32x128xf32>
    tpu.vector_store %arg5[%c0_7, %c0_8], %14 {strides = array<i32>} : memref<32x128xf32, #tpu.memory_space<vmem>>, vector<32x128xf32>,
    return
  }
  func.func @transform_0(%arg0: i32) -> (i32, i32) {
    %c0_i32 = arith.constant 0 : i32
    %c0_i32_0 = arith.constant 0 : i32
    return %arg0, %c0_i32 : i32, i32
  }
  func.func @transform_1(%arg0: i32) -> (i32, i32) {
    %c0_i32 = arith.constant 0 : i32
    %c0_i32_0 = arith.constant 0 : i32
    %c0_i32_1 = arith.constant 0 : i32
    return %c0_i32, %c0_i32_0 : i32, i32
  }
  func.func @transform_2(%arg0: i32) -> (i32, i32) {
    %c0_i32 = arith.constant 0 : i32
    %c0_i32_0 = arith.constant 0 : i32
    %c0_i32_1 = arith.constant 0 : i32
    return %c0_i32, %c0_i32_0 : i32, i32
  }
  func.func @transform_3(%arg0: i32) -> (i32, i32) {
    %c0_i32 = arith.constant 0 : i32
    %c0_i32_0 = arith.constant 0 : i32
    %c0_i32_1 = arith.constant 0 : i32
    return %c0_i32, %c0_i32_0 : i32, i32
  }
  func.func @transform_4(%arg0: i32) -> (i32, i32) {
    %c0_i32 = arith.constant 0 : i32
    %c0_i32_0 = arith.constant 0 : i32
    return %arg0, %c0_i32 : i32, i32
  }
}

</mosaic_0001>

<llo_original>
// kernel: tpu_custom_call.1
$region0: #{tpu_custom_call.1}
  #allocation0 [shape = 'u32[]', space=smem, size = 0x4, offset = 0x4, fixed_abs, tag = 'smem constant byte address 0x4 - core index']
  #allocation1 [shape = 'u32[72,128]{1,0:T(1,128)}', space=vmem, size = 0x9000, scoped, tag = 'internal scratch']
  %s0 = inlined_call_operand.vmem [shape: f32[32,1], index: 0, kind: input, shape index: {}]
  %s1 = inlined_call_operand.vmem [shape: f32[1,128], index: 1, kind: input, shape index: {}]
  %s2 = inlined_call_operand.vmem [shape: f32[1,128], index: 2, kind: input, shape index: {}]
  %s3 = inlined_call_operand.vmem [shape: f32[1,128], index: 3, kind: input, shape index: {}]
  %s4 = inlined_call_operand.hbm [shape: f32[32,128], index: 4, kind: output, shape index: {}]
  %s5 = sld [smem:[#allocation0]]
  $region26: #{tpu_custom_call.1} parent=0
    _
  %s7 = ssub.s32 1, %s5
  %s8 = scalar_select 0, %s7, %s5
  $region1: #{tpu_custom_call.1} parent=0
    #allocation2 [shape = 'u8[16384]{0}', space=vmem, size = 0x4000, scoped, tag = 'output window, operand 0, single buffered']
    #allocation3 [shape = 's32[1]{0}', space=sflag, size = 0x4, scoped, tag = 'scoped memory for tpu_custom_call.1']
    %9 = vsyncpa [#allocation3], 0
    // Predicated region
    $region2: #{tpu_custom_call.1} parent=1 // pred_check
      _
    $region3: #{tpu_custom_call.1} parent=1 // pred_check_branch
      %11 = sbr.rel (0) target = $region5
    $region4: #{tpu_custom_call.1} parent=1 // pred_region
      _
    $region5: #{tpu_custom_call.1} parent=1 // pred_fallthru
      _
    // Predicated region
    $region6: #{tpu_custom_call.1} parent=1 // pred_check
      _
    $region7: #{tpu_custom_call.1} parent=1 // pred_check_branch
      %13 = sbr.rel (0) target = $region9
    $region8: #{tpu_custom_call.1} parent=1 // pred_region
      _
    $region9: #{tpu_custom_call.1} parent=1 // pred_fallthru
      _
    // Predicated region
    $region10: #{tpu_custom_call.1} parent=1 // pred_check
      _
    $region11: #{tpu_custom_call.1} parent=1 // pred_check_branch
      %15 = sbr.rel (0) target = $region13
    $region12: #{tpu_custom_call.1} parent=1 // pred_region
      _
    $region13: #{tpu_custom_call.1} parent=1 // pred_fallthru
      _
    // Predicated region
    $region14: #{tpu_custom_call.1} parent=1 // pred_check
      _
    $region15: #{tpu_custom_call.1} parent=1 // pred_check_branch
      %17 = sbr.rel (0) target = $region17
    $region16: #{tpu_custom_call.1} parent=1 // pred_region
      _
    $region17: #{tpu_custom_call.1} parent=1 // pred_fallthru
      _
    %v18 = vld [vmem:[%s0] sm:$0xff]
    %v19 = vld [vmem:[%s0 + $0x8] sm:$0xff]
    %v20 = vld [vmem:[%s0 + $0x10] sm:$0xff]
    %v21 = vld [vmem:[%s0 + $0x18] sm:$0xff]
    %v22 = vld [vmem:[%s1] sm:$0x1]
    %24 = vset.pattern.permute.xlu0 0
    %25 = vperm.xlu0 %24, %v18
    %v26 = vpop.permute.xlu0 %25
    %29 = vset.pattern.permute.xlu0 0
    %30 = vperm.xlu0 %29, %v19
    %v31 = vpop.permute.xlu0 %30
    %34 = vset.pattern.permute.xlu0 0
    %35 = vperm.xlu0 %34, %v20
    %v36 = vpop.permute.xlu0 %35
    %39 = vset.pattern.permute.xlu0 0
    %40 = vperm.xlu0 %39, %v21
    %v41 = vpop.permute.xlu0 %40
    %v44 = vperm.slane %v22, 0
    %v46 = vsub.f32 %v26, %v44
    %v47 = vsub.f32 %v31, %v44
    %v48 = vsub.f32 %v36, %v44
    %v49 = vsub.f32 %v41, %v44
    %v50 = vld [vmem:[%s2] sm:$0x1]
    %v52 = vperm.slane %v50, 0
    %v54 = vmul.f32 %v46, %v52
    %v55 = vmul.f32 %v47, %v52
    %v56 = vmul.f32 %v48, %v52
    %v57 = vmul.f32 %v49, %v52
    %v58 = vmul.f32 %v54, -0.5
    %v59 = vmul.f32 %v55, -0.5
    %v60 = vmul.f32 %v56, -0.5
    %v61 = vmul.f32 %v57, -0.5
    %v62 = vmul.f32 %v58, %v54
    %v63 = vmul.f32 %v59, %v55
    %v64 = vmul.f32 %v60, %v56
    %v65 = vmul.f32 %v61, %v57
    %v66 = vmul.f32 %v62, 1.442695
    %v67 = vpow.pop %v66
    %v68 = vmul.f32 %v63, 1.442695
    %v69 = vpow.pop %v68
    %v70 = vmul.f32 %v64, 1.442695
    %v71 = vpow.pop %v70
    %v72 = vmul.f32 %v65, 1.442695
    %v73 = vpow.pop %v72
    %v74 = vld [vmem:[%s3] sm:$0x1]
    %v76 = vperm.slane %v74, 0
    %v78 = vmul.f32 %v67, %v76
    %v79 = vmul.f32 %v69, %v76
    %v80 = vmul.f32 %v71, %v76
    %v81 = vmul.f32 %v73, %v76
    %82 = vst [vmem:[#allocation2] sm:$0xff] %v78
    %83 = vst [vmem:[#allocation2 + $0x8] sm:$0xff] %v79
    %84 = vst [vmem:[#allocation2 + $0x10] sm:$0xff] %v80
    %85 = vst [vmem:[#allocation2 + $0x18] sm:$0xff] %v81
    // Predicated region
    $region18: #{tpu_custom_call.1} parent=1 // pred_check
      _
    $region19: #{tpu_custom_call.1} parent=1 // pred_check_branch
      %87 = sbr.rel (0) target = $region21
    $region20: #{tpu_custom_call.1} parent=1 // pred_region
      %89 = vsyncadd [#allocation3], 0
      %s90 = sshll.u32 [#allocation2], 4
      %s91 = int_to_ptr.vmem [resolvable:$true] %s90
      %s92 = sshll.u32 %s4, 4
      %s93 = int_to_ptr.hbm [resolvable:$true] %s92
      %98 = dma.vmem_to_hbm [thread:$0]  %s91, 512, %s93, [#allocation3], 128, 128, 8
    $region21: #{tpu_custom_call.1} parent=1 // pred_fallthru
      _
    // Predicated region
    $region22: #{tpu_custom_call.1} parent=1 // pred_check
      _
    $region23: #{tpu_custom_call.1} parent=1 // pred_check_branch
      %100 = sbr.rel (0) target = $region25
    $region24: #{tpu_custom_call.1} parent=1 // pred_region
      %102 = dma.done [#allocation3], 512
    $region25: #{tpu_custom_call.1} parent=1 // pred_fallthru
      _
    %103 = vsyncpa [#allocation3], 1

</llo_original>
